<compile_context>
chip_gen: v7x
topology: tpu7x:2x2x1
jax: 0.10.0
libtpu: 0.0.40
codegen_flags: <defaults>
</compile_context>

<pallas_src>
import math
import jax
import jax.numpy as jnp
from jax import lax
from jax.experimental import pallas as pl
from jax.experimental.pallas import tpu as pltpu


def _round_up(x, m):
    return ((x + m - 1) // m) * m


def _gelu_exact(x):
    # PyTorch nn.GELU default: exact erf form (kept for bit-level semantics).
    return 0.5 * x * (1.0 + lax.erf(x * (1.0 / math.sqrt(2.0))))


# ---------------------------------- kernel ----------------------------------
def mlp_kernel(x_ref, w1_ref, b1_ref, w2_ref, b2_ref, o_ref):
    # x tile: (tile_m, C_in) f32.  Cast to bf16 only at the dot boundaries
    # (MXU-native bf16 on v6e/v7x, halves weight DMA bytes everywhere);
    # accumulate in f32; keep elementwise math in f32 (v5e-safe).
    x = x_ref[...]
    h = jnp.dot(x.astype(jnp.bfloat16), w1_ref[...],
                preferred_element_type=jnp.float32) + b1_ref[...]
    h = _gelu_exact(h)
    y = jnp.dot(h.astype(jnp.bfloat16), w2_ref[...],
                preferred_element_type=jnp.float32) + b2_ref[...]
    o_ref[...] = y.astype(o_ref.dtype)


# --------------------------------- wrapper -----------------------------------
def mlp_forward(x, params, *, tile_m=256):
    """x: (..., C_in) f32.
    params = (w1 bf16 (C_in, HID), b1 f32 (1, HID),
              w2 bf16 (HID, C_out), b2 f32 (1, C_out))
    returns (..., C_out) f32."""
    w1, b1, w2, b2 = params
    c_in = x.shape[-1]
    hid = w1.shape[1]
    c_out = w2.shape[1]

    lead = x.shape[:-1]
    x2 = x.reshape(-1, c_in)              # fold batch/sequence -> rows
    m = x2.shape[0]

    # Row-tile: one grid step at small sizes, tiles of `tile_m` rows at scale.
    tile = min(tile_m, _round_up(m, 8))
    m_pad = _round_up(m, tile)
    if m_pad != m:
        x2 = jnp.pad(x2, ((0, m_pad - m), (0, 0)))

    grid_spec = pltpu.PrefetchScalarGridSpec(
        num_scalar_prefetch=0,
        grid=(m_pad // tile,),
        in_specs=[
            pl.BlockSpec((tile, c_in), lambda i: (i, 0)),    # x row-tile
            pl.BlockSpec((c_in, hid), lambda i: (0, 0)),     # fc1 weight (in, out)
            pl.BlockSpec((1, hid), lambda i: (0, 0)),        # fc1 bias
            pl.BlockSpec((hid, c_out), lambda i: (0, 0)),    # fc2 weight (in, out)
            pl.BlockSpec((1, c_out), lambda i: (0, 0)),      # fc2 bias
        ],
        out_specs=pl.BlockSpec((tile, c_out), lambda i: (i, 0)),
    )
    out = pl.pallas_call(
        mlp_kernel,
        out_shape=jax.ShapeDtypeStruct((m_pad, c_out), jnp.float32),
        grid_spec=grid_spec,
        # independent row-tiles -> shard across TCs on v7x; no-op on v5e/v6e
        compiler_params=pltpu.CompilerParams(dimension_semantics=("parallel",)),
    )(x2, w1, b1, w2, b2)
    return out[:m].reshape(*lead, c_out)


# ------------------------------------ main ------------------------------------
if __name__ == "__main__":
    # Small but lane-dense shapes (last dims multiples of 128).
    B, N = 2, 8
    C_IN = 128
    HID = 4 * C_IN          # mlp_ratio = 4
    C_OUT = C_IN

    key = jax.random.PRNGKey(0)
    k1, k2, k3, k4, k5 = jax.random.split(key, 5)

    # Linear weights stored pre-transposed to (in, out).
    w1 = 0.02 * jax.random.normal(k1, (C_IN, HID), jnp.float32)
    b1 = 0.02 * jax.random.normal(k2, (1, HID), jnp.float32)
    w2 = 0.02 * jax.random.normal(k3, (HID, C_OUT), jnp.float32)
    b2 = 0.02 * jax.random.normal(k4, (1, C_OUT), jnp.float32)
    x = jax.random.normal(k5, (B, N, C_IN), jnp.float32)

    # Kernel params: bf16 weights (MXU operands), f32 biases (post-accum add).
    params_kernel = (w1.astype(jnp.bfloat16), b1, w2.astype(jnp.bfloat16), b2)

    out = jax.block_until_ready(mlp_forward(x, params_kernel))

    # Pure-JAX f32 reference (dropout with drop=0.0 / eval is identity).
    def mlp_reference(xr):
        h = xr @ w1 + b1[0]
        h = 0.5 * h * (1.0 + lax.erf(h / math.sqrt(2.0)))
        return h @ w2 + b2[0]

    ref = mlp_reference(x)

    assert out.shape == (B, N, C_OUT)
    # bf16 matmul operands -> loosened tolerance vs the f32 reference.
    assert jnp.allclose(out, ref, atol=2e-2, rtol=2e-2), "mismatch vs reference"
    print("KERNEL_OK")
</pallas_src>

<mosaic_0001>
module attributes {stable_mosaic.version = 11 : i64} {
  func.func @mlp_kernel(%arg0: i32, %arg1: memref<16x128xf32, #tpu.memory_space<vmem>>, %arg2: memref<128x512xbf16, #tpu.memory_space<vmem>>, %arg3: memref<1x512xf32, #tpu.memory_space<vmem>>, %arg4: memref<512x128xbf16, #tpu.memory_space<vmem>>, %arg5: memref<1x128xf32, #tpu.memory_space<vmem>>, %arg6: memref<16x128xf32, #tpu.memory_space<vmem>>) attributes {dimension_semantics = [#tpu.dimension_semantics<parallel>], iteration_bounds = array<i64: 1>, scalar_prefetch = 0 : i64, scratch_operands = 0 : i64, tpu.core_type = #tpu.core_type<tc>, window_params = [{transform_indices = @transform_0, window_bounds = array<i64: 16, 128>}, {pipeline_mode = #tpu.pipeline_mode<synchronous>, transform_indices = @transform_1, window_bounds = array<i64: 128, 512>}, {pipeline_mode = #tpu.pipeline_mode<synchronous>, transform_indices = @transform_2, window_bounds = array<i64: 1, 512>}, {pipeline_mode = #tpu.pipeline_mode<synchronous>, transform_indices = @transform_3, window_bounds = array<i64: 512, 128>}, {pipeline_mode = #tpu.pipeline_mode<synchronous>, transform_indices = @transform_4, window_bounds = array<i64: 1, 128>}, {transform_indices = @transform_5, window_bounds = array<i64: 16, 128>}]} {
    %c0 = arith.constant 0 : index
    %c0_0 = arith.constant 0 : index
    %0 = vector.load %arg1[%c0, %c0_0] : memref<16x128xf32, #tpu.memory_space<vmem>>, vector<16x128xf32>
    %1 = arith.truncf %0 : vector<16x128xf32> to vector<16x128xbf16>
    %c0_1 = arith.constant 0 : index
    %c0_2 = arith.constant 0 : index
    %2 = vector.load %arg2[%c0_1, %c0_2] : memref<128x512xbf16, #tpu.memory_space<vmem>>, vector<128x512xbf16>
    %cst = arith.constant dense<0.000000e+00> : vector<16x512xf32>
    %3 = tpu.matmul %1, %2, %cst {dimension_numbers = #tpu.dot_dimension_numbers<[1], [0], [0], [1], [0, 0, 1, 1], [], []>} : vector<16x128xbf16>, vector<128x512xbf16>, vector<16x512xf32> -> vector<16x512xf32>
    %c0_3 = arith.constant 0 : index
    %c0_4 = arith.constant 0 : index
    %4 = vector.load %arg3[%c0_3, %c0_4] : memref<1x512xf32, #tpu.memory_space<vmem>>, vector<1x512xf32>
    %5 = vector.broadcast %4 : vector<1x512xf32> to vector<16x512xf32>
    %6 = arith.addf %3, %5 : vector<16x512xf32>
    %cst_5 = arith.constant 5.000000e-01 : f32
    %7 = vector.broadcast %cst_5 : f32 to vector<16x512xf32>
    %8 = arith.mulf %7, %6 : vector<16x512xf32>
    %cst_6 = arith.constant 0.707106769 : f32
    %9 = vector.broadcast %cst_6 : f32 to vector<16x512xf32>
    %10 = arith.mulf %6, %9 : vector<16x512xf32>
    %11 = math.erf %10 : vector<16x512xf32>
    %cst_7 = arith.constant 1.000000e+00 : f32
    %12 = vector.broadcast %cst_7 : f32 to vector<16x512xf32>
    %13 = arith.addf %12, %11 : vector<16x512xf32>
    %14 = arith.mulf %8, %13 : vector<16x512xf32>
    %15 = arith.truncf %14 : vector<16x512xf32> to vector<16x512xbf16>
    %c0_8 = arith.constant 0 : index
    %c0_9 = arith.constant 0 : index
    %16 = vector.load %arg4[%c0_8, %c0_9] : memref<512x128xbf16, #tpu.memory_space<vmem>>, vector<512x128xbf16>
    %cst_10 = arith.constant dense<0.000000e+00> : vector<16x128xf32>
    %17 = tpu.matmul %15, %16, %cst_10 {dimension_numbers = #tpu.dot_dimension_numbers<[1], [0], [0], [1], [0, 0, 1, 1], [], []>} : vector<16x512xbf16>, vector<512x128xbf16>, vector<16x128xf32> -> vector<16x128xf32>
    %c0_11 = arith.constant 0 : index
    %c0_12 = arith.constant 0 : index
    %18 = vector.load %arg5[%c0_11, %c0_12] : memref<1x128xf32, #tpu.memory_space<vmem>>, vector<1x128xf32>
    %19 = vector.broadcast %18 : vector<1x128xf32> to vector<16x128xf32>
    %20 = arith.addf %17, %19 : vector<16x128xf32>
    %c0_13 = arith.constant 0 : index
    %c0_14 = arith.constant 0 : index
    %21 = vector.load %arg6[%c0_13, %c0_14] : memref<16x128xf32, #tpu.memory_space<vmem>>, vector<16x128xf32>
    tpu.vector_store %arg6[%c0_13, %c0_14], %20 {strides = array<i32>} : memref<16x128xf32, #tpu.memory_space<vmem>>, vector<16x128xf32>,
    return
  }
  func.func @transform_0(%arg0: i32) -> (i32, i32) {
    %c0_i32 = arith.constant 0 : i32
    %c0_i32_0 = arith.constant 0 : i32
    return %arg0, %c0_i32 : i32, i32
  }
  func.func @transform_1(%arg0: i32) -> (i32, i32) {
    %c0_i32 = arith.constant 0 : i32
    %c0_i32_0 = arith.constant 0 : i32
    %c0_i32_1 = arith.constant 0 : i32
    return %c0_i32, %c0_i32_0 : i32, i32
  }
  func.func @transform_2(%arg0: i32) -> (i32, i32) {
    %c0_i32 = arith.constant 0 : i32
    %c0_i32_0 = arith.constant 0 : i32
    %c0_i32_1 = arith.constant 0 : i32
    return %c0_i32, %c0_i32_0 : i32, i32
  }
  func.func @transform_3(%arg0: i32) -> (i32, i32) {
    %c0_i32 = arith.constant 0 : i32
    %c0_i32_0 = arith.constant 0 : i32
    %c0_i32_1 = arith.constant 0 : i32
    return %c0_i32, %c0_i32_0 : i32, i32
  }
  func.func @transform_4(%arg0: i32) -> (i32, i32) {
    %c0_i32 = arith.constant 0 : i32
    %c0_i32_0 = arith.constant 0 : i32
    %c0_i32_1 = arith.constant 0 : i32
    return %c0_i32, %c0_i32_0 : i32, i32
  }
  func.func @transform_5(%arg0: i32) -> (i32, i32) {
    %c0_i32 = arith.constant 0 : i32
    %c0_i32_0 = arith.constant 0 : i32
    return %arg0, %c0_i32 : i32, i32
  }
}

</mosaic_0001>

<llo_original>
// kernel: tpu_custom_call.1
$region0: #{tpu_custom_call.1}
  #allocation0 [shape = 'u32[]', space=smem, size = 0x4, offset = 0x4, fixed_abs, tag = 'smem constant byte address 0x4 - core index']
  #allocation1 [shape = 'u32[144,128]{1,0:T(1,128)}', space=vmem, size = 0x12000, scoped, tag = 'internal scratch']
  %s0 = inlined_call_operand.hbm [shape: f32[16,128], index: 0, kind: input, shape index: {}]
  %s1 = inlined_call_operand.hbm [shape: bf16[128,512], index: 1, kind: input, shape index: {}]
  %s2 = inlined_call_operand.vmem [shape: f32[1,512], index: 2, kind: input, shape index: {}]
  %s3 = inlined_call_operand.hbm [shape: bf16[512,128], index: 3, kind: input, shape index: {}]
  %s4 = inlined_call_operand.vmem [shape: f32[1,128], index: 4, kind: input, shape index: {}]
  %s5 = inlined_call_operand.hbm [shape: f32[16,128], index: 5, kind: output, shape index: {}]
  %s6 = sld [smem:[#allocation0]]
  $region42: #{tpu_custom_call.1} parent=0
    _
  %s8 = ssub.s32 1, %s6
  %s9 = scalar_select 0, %s8, %s6
  $region1: #{tpu_custom_call.1} parent=0
    #allocation2 [shape = 'u8[8192]{0}', space=vmem, size = 0x2000, scoped, tag = 'input window, operand 0, single buffered']
    #allocation3 [shape = 's32[1]{0}', space=sflag, size = 0x4, scoped, tag = 'scoped memory for tpu_custom_call.1']
    #allocation4 [shape = 's32[1]{0}', space=sflag, size = 0x4, scoped, tag = 'scoped memory for tpu_custom_call.1']
    #allocation5 [shape = 'u8[131072]{0}', space=vmem, size = 0x20000, scoped, tag = 'input window, operand 1, single buffered']
    #allocation6 [shape = 's32[1]{0}', space=sflag, size = 0x4, scoped, tag = 'scoped memory for tpu_custom_call.1']
    #allocation7 [shape = 'u8[131072]{0}', space=vmem, size = 0x20000, scoped, tag = 'input window, operand 3, single buffered']
    #allocation8 [shape = 'u8[8192]{0}', space=vmem, size = 0x2000, scoped, tag = 'output window, operand 0, single buffered']
    %10 = vsyncpa [#allocation3], 0
    %11 = vsyncpa [#allocation6], 0
    %12 = vsyncpa [#allocation4], 0
    // Predicated region
    $region2: #{tpu_custom_call.1} parent=1 // pred_check
      _
    $region3: #{tpu_custom_call.1} parent=1 // pred_check_branch
      %14 = sbr.rel (0) target = $region5
    $region4: #{tpu_custom_call.1} parent=1 // pred_region
      %s16 = ssub.s32 256, 256
      %17 = vsyncadd [#allocation3], %s16
      %s18 = sshll.u32 [#allocation2], 4
      %s19 = int_to_ptr.vmem [resolvable:$true] %s18
      %24 = dma.hbm_to_vmem [thread:$0]  %s0, 256, %s19, [#allocation3], 128, 128, 8
    $region5: #{tpu_custom_call.1} parent=1 // pred_fallthru
      _
    // Predicated region
    $region6: #{tpu_custom_call.1} parent=1 // pred_check
      _
    $region7: #{tpu_custom_call.1} parent=1 // pred_check_branch
      %26 = sbr.rel (0) target = $region9
    $region8: #{tpu_custom_call.1} parent=1 // pred_region
      %s28 = ssub.s32 4096, 4096
      %29 = vsyncadd [#allocation6], %s28
      %s30 = sshll.u32 [#allocation5], 4
      %s31 = int_to_ptr.vmem [resolvable:$true] %s30
      %36 = dma.hbm_to_vmem [thread:$0]  %s1, 4096, %s31, [#allocation6], 256, 256, 16
    $region9: #{tpu_custom_call.1} parent=1 // pred_fallthru
      _
    // Predicated region
    $region10: #{tpu_custom_call.1} parent=1 // pred_check
      _
    $region11: #{tpu_custom_call.1} parent=1 // pred_check_branch
      %38 = sbr.rel (0) target = $region13
    $region12: #{tpu_custom_call.1} parent=1 // pred_region
      _
    $region13: #{tpu_custom_call.1} parent=1 // pred_fallthru
      _
    // Predicated region
    $region14: #{tpu_custom_call.1} parent=1 // pred_check
      _
    $region15: #{tpu_custom_call.1} parent=1 // pred_check_branch
      %40 = sbr.rel (0) target = $region17
    $region16: #{tpu_custom_call.1} parent=1 // pred_region
      %s42 = ssub.s32 4096, 4096
      %43 = vsyncadd [#allocation6], %s42
      %s44 = sshll.u32 [#allocation7], 4
      %s45 = int_to_ptr.vmem [resolvable:$true] %s44
      %50 = dma.hbm_to_vmem [thread:$0]  %s3, 4096, %s45, [#allocation6], 64, 64, 4
    $region17: #{tpu_custom_call.1} parent=1 // pred_fallthru
      _
    // Predicated region
    $region18: #{tpu_custom_call.1} parent=1 // pred_check
      _
    $region19: #{tpu_custom_call.1} parent=1 // pred_check_branch
      %52 = sbr.rel (0) target = $region21
    $region20: #{tpu_custom_call.1} parent=1 // pred_region
      _
    $region21: #{tpu_custom_call.1} parent=1 // pred_fallthru
      _
    // Predicated region
    $region22: #{tpu_custom_call.1} parent=1 // pred_check
      _
    $region23: #{tpu_custom_call.1} parent=1 // pred_check_branch
      %54 = sbr.rel (0) target = $region25
    $region24: #{tpu_custom_call.1} parent=1 // pred_region
      %55 = dma.done [#allocation3], 256
    $region25: #{tpu_custom_call.1} parent=1 // pred_fallthru
      _
    // Predicated region
    $region26: #{tpu_custom_call.1} parent=1 // pred_check
      _
    $region27: #{tpu_custom_call.1} parent=1 // pred_check_branch
      %57 = sbr.rel (0) target = $region29
    $region28: #{tpu_custom_call.1} parent=1 // pred_region
      %58 = dma.done [#allocation6], 4096
    $region29: #{tpu_custom_call.1} parent=1 // pred_fallthru
      _
    // Predicated region
    $region30: #{tpu_custom_call.1} parent=1 // pred_check
      _
    $region31: #{tpu_custom_call.1} parent=1 // pred_check_branch
      %60 = sbr.rel (0) target = $region33
    $region32: #{tpu_custom_call.1} parent=1 // pred_region
      %61 = dma.done [#allocation6], 4096
    $region33: #{tpu_custom_call.1} parent=1 // pred_fallthru
      _
    %v63 = vld [vmem:[#allocation2] sm:$0xff]
    %v64 = vld [vmem:[#allocation2 + $0x8] sm:$0xff]
    %v65 = vpack.c.bf16 %v64, %v63
    %v66 = vld [vmem:[#allocation5] sm:$0xff]
    %v67 = vld [vmem:[#allocation5 + $0x8] sm:$0xff]
    %v68 = vld [vmem:[#allocation5 + $0x10] sm:$0xff]
    %v69 = vld [vmem:[#allocation5 + $0x18] sm:$0xff]
    %v70 = vld [vmem:[#allocation5 + $0x20] sm:$0xff]
    %v71 = vld [vmem:[#allocation5 + $0x28] sm:$0xff]
    %v72 = vld [vmem:[#allocation5 + $0x30] sm:$0xff]
    %v73 = vld [vmem:[#allocation5 + $0x38] sm:$0xff]
    %v74 = vld [vmem:[#allocation5 + $0x40] sm:$0xff]
    %v75 = vld [vmem:[#allocation5 + $0x48] sm:$0xff]
    %v76 = vld [vmem:[#allocation5 + $0x50] sm:$0xff]
    %v77 = vld [vmem:[#allocation5 + $0x58] sm:$0xff]
    %v78 = vld [vmem:[#allocation5 + $0x60] sm:$0xff]
    %v79 = vld [vmem:[#allocation5 + $0x68] sm:$0xff]
    %v80 = vld [vmem:[#allocation5 + $0x70] sm:$0xff]
    %v81 = vld [vmem:[#allocation5 + $0x78] sm:$0xff]
    %v82 = vld [vmem:[#allocation5 + $0x80] sm:$0xff]
    %v83 = vld [vmem:[#allocation5 + $0x88] sm:$0xff]
    %v84 = vld [vmem:[#allocation5 + $0x90] sm:$0xff]
    %v85 = vld [vmem:[#allocation5 + $0x98] sm:$0xff]
    %v86 = vld [vmem:[#allocation5 + $0xa0] sm:$0xff]
    %v87 = vld [vmem:[#allocation5 + $0xa8] sm:$0xff]
    %v88 = vld [vmem:[#allocation5 + $0xb0] sm:$0xff]
    %v89 = vld [vmem:[#allocation5 + $0xb8] sm:$0xff]
    %v90 = vld [vmem:[#allocation5 + $0xc0] sm:$0xff]
    %v91 = vld [vmem:[#allocation5 + $0xc8] sm:$0xff]
    %v92 = vld [vmem:[#allocation5 + $0xd0] sm:$0xff]
    %v93 = vld [vmem:[#allocation5 + $0xd8] sm:$0xff]
    %v94 = vld [vmem:[#allocation5 + $0xe0] sm:$0xff]
    %v95 = vld [vmem:[#allocation5 + $0xe8] sm:$0xff]
    %v96 = vld [vmem:[#allocation5 + $0xf0] sm:$0xff]
    %v97 = vld [vmem:[#allocation5 + $0xf8] sm:$0xff]
    %v98 = vld [vmem:[%s2] sm:$0xf]
    %v100 = vlaneseq
    %v101 = vshrl.u32 %v100, 7
    %v102 = vsub.s32 0, %v101
    %v103 = vrot.slane %v98, %v102
    %v104 = vlaneseq
    %v105 = vshrl.u32 %v104, 7
    %v106 = vsub.s32 1, %v105
    %v107 = vrot.slane %v98, %v106
    %v108 = vlaneseq
    %v109 = vshrl.u32 %v108, 7
    %v110 = vsub.s32 2, %v109
    %v111 = vrot.slane %v98, %v110
    %v112 = vlaneseq
    %v113 = vshrl.u32 %v112, 7
    %v114 = vsub.s32 3, %v113
    %v115 = vrot.slane %v98, %v114
    %v152 = vunpack.c.l.b16 %v66
    %v153 = vunpack.c.h.b16 %v66
    %v154 = vunpack.c.l.b16 %v67
    %v155 = vunpack.c.h.b16 %v67
    %v156 = vunpack.c.l.b16 %v68
    %v157 = vunpack.c.h.b16 %v68
    %v158 = vunpack.c.l.b16 %v69
    %v159 = vunpack.c.h.b16 %v69
    %v160 = vunpack.c.l.b16 %v70
    %v161 = vunpack.c.h.b16 %v70
    %v162 = vunpack.c.l.b16 %v71
    %v163 = vunpack.c.h.b16 %v71
    %v164 = vunpack.c.l.b16 %v72
    %v165 = vunpack.c.h.b16 %v72
    %v166 = vunpack.c.l.b16 %v73
    %v167 = vunpack.c.h.b16 %v73
    %v168 = vunpack.c.l.b16 %v74
    %v169 = vunpack.c.h.b16 %v74
    %v170 = vunpack.c.l.b16 %v75
    %v171 = vunpack.c.h.b16 %v75
    %v172 = vunpack.c.l.b16 %v76
    %v173 = vunpack.c.h.b16 %v76
    %v174 = vunpack.c.l.b16 %v77
    %v175 = vunpack.c.h.b16 %v77
    %v176 = vunpack.c.l.b16 %v78
    %v177 = vunpack.c.h.b16 %v78
    %v178 = vunpack.c.l.b16 %v79
    %v179 = vunpack.c.h.b16 %v79
    %v180 = vunpack.c.l.b16 %v80
    %v181 = vunpack.c.h.b16 %v80
    %v182 = vunpack.c.l.b16 %v81
    %v183 = vunpack.c.h.b16 %v81
    %v184 = vunpack.c.l.b16 %v82
    %v185 = vunpack.c.h.b16 %v82
    %v186 = vunpack.c.l.b16 %v83
    %v187 = vunpack.c.h.b16 %v83
    %v188 = vunpack.c.l.b16 %v84
    %v189 = vunpack.c.h.b16 %v84
    %v190 = vunpack.c.l.b16 %v85
    %v191 = vunpack.c.h.b16 %v85
    %v192 = vunpack.c.l.b16 %v86
    %v193 = vunpack.c.h.b16 %v86
    %v194 = vunpack.c.l.b16 %v87
    %v195 = vunpack.c.h.b16 %v87
    %v196 = vunpack.c.l.b16 %v88
    %v197 = vunpack.c.h.b16 %v88
    %v198 = vunpack.c.l.b16 %v89
    %v199 = vunpack.c.h.b16 %v89
    %v200 = vunpack.c.l.b16 %v90
    %v201 = vunpack.c.h.b16 %v90
    %v202 = vunpack.c.l.b16 %v91
    %v203 = vunpack.c.h.b16 %v91
    %v204 = vunpack.c.l.b16 %v92
    %v205 = vunpack.c.h.b16 %v92
    %v206 = vunpack.c.l.b16 %v93
    %v207 = vunpack.c.h.b16 %v93
    %v208 = vunpack.c.l.b16 %v94
    %v209 = vunpack.c.h.b16 %v94
    %v210 = vunpack.c.l.b16 %v95
    %v211 = vunpack.c.h.b16 %v95
    %v212 = vunpack.c.l.b16 %v96
    %v213 = vunpack.c.h.b16 %v96
    %v214 = vunpack.c.l.b16 %v97
    %v215 = vunpack.c.h.b16 %v97
    %v216 = vpack.c.b16 %v156, %v152
    %v217 = vpack.c.b16 %v157, %v153
    %v218 = vpack.c.b16 %v158, %v154
    %v219 = vpack.c.b16 %v159, %v155
    %v220 = vpack.c.b16 %v164, %v160
    %v221 = vpack.c.b16 %v165, %v161
    %v222 = vpack.c.b16 %v166, %v162
    %v223 = vpack.c.b16 %v167, %v163
    %v224 = vpack.c.b16 %v172, %v168
    %v225 = vpack.c.b16 %v173, %v169
    %v226 = vpack.c.b16 %v174, %v170
    %v227 = vpack.c.b16 %v175, %v171
    %v228 = vpack.c.b16 %v180, %v176
    %v229 = vpack.c.b16 %v181, %v177
    %v230 = vpack.c.b16 %v182, %v178
    %v231 = vpack.c.b16 %v183, %v179
    %v232 = vpack.c.b16 %v188, %v184
    %v233 = vpack.c.b16 %v189, %v185
    %v234 = vpack.c.b16 %v190, %v186
    %v235 = vpack.c.b16 %v191, %v187
    %v236 = vpack.c.b16 %v196, %v192
    %v237 = vpack.c.b16 %v197, %v193
    %v238 = vpack.c.b16 %v198, %v194
    %v239 = vpack.c.b16 %v199, %v195
    %v240 = vpack.c.b16 %v204, %v200
    %v241 = vpack.c.b16 %v205, %v201
    %v242 = vpack.c.b16 %v206, %v202
    %v243 = vpack.c.b16 %v207, %v203
    %v244 = vpack.c.b16 %v212, %v208
    %v245 = vpack.c.b16 %v213, %v209
    %v246 = vpack.c.b16 %v214, %v210
    %v247 = vpack.c.b16 %v215, %v211
    %280 = vmatprep.subr.bf16.mxu0 %v217
    %281 = vmatpush1.bf16.msra.mxu0 %v216
    %282 = vmatprep.subr.bf16.mxu0 %v221
    %283 = vmatpush1.bf16.msra.mxu0 %v220
    %284 = vmatprep.subr.bf16.mxu0 %v225
    %285 = vmatpush1.bf16.msra.mxu0 %v224
    %286 = vmatprep.subr.bf16.mxu0 %v229
    %287 = vmatpush1.bf16.msra.mxu0 %v228
    %288 = vmatprep.subr.bf16.mxu0 %v233
    %289 = vmatpush1.bf16.msra.mxu0 %v232
    %290 = vmatprep.subr.bf16.mxu0 %v237
    %291 = vmatpush1.bf16.msra.mxu0 %v236
    %292 = vmatprep.subr.bf16.mxu0 %v241
    %293 = vmatpush1.bf16.msra.mxu0 %v240
    %294 = vmatprep.subr.bf16.mxu0 %v245
    %295 = vmatpush1.bf16.msra.mxu0 %v244
    %296 = vmatprep.subr.bf16.mxu0 0
    %297 = vmatpush1.bf16.msra.mxu0 0
    %298 = vmatprep.subr.bf16.mxu0 0
    %299 = vmatpush1.bf16.msra.mxu0 0
    %300 = vmatprep.subr.bf16.mxu0 0
    %301 = vmatpush1.bf16.msra.mxu0 0
    %302 = vmatprep.subr.bf16.mxu0 0
    %303 = vmatpush1.bf16.msra.mxu0 0
    %304 = vmatprep.subr.bf16.mxu0 0
    %305 = vmatpush1.bf16.msra.mxu0 0
    %306 = vmatprep.subr.bf16.mxu0 0
    %307 = vmatpush1.bf16.msra.mxu0 0
    %308 = vmatprep.subr.bf16.mxu0 0
    %309 = vmatpush1.bf16.msra.mxu0 0
    %310 = vmatprep.subr.bf16.mxu0 0
    %311 = vmatpush1.bf16.msra.mxu0 0
    %312 = vmatprep.mubr.bf16.mxu0 0
    %313 = vmatmul.mubr.bf16.gmra.mrb[0].mxu0 %v65
    %v314 = vpop.f32.mrb[0].mxu0
    %v315 = vadd.f32 %v103, %v314
    %v316 = vpop.f32.mrb[0].mxu0
    %v317 = vadd.f32 %v107, %v316
    %v318 = vpop.f32.mrb[0].mxu0
    %v319 = vadd.f32 %v103, %v318
    %v320 = vpop.f32.mrb[0].mxu0
    %v321 = vadd.f32 %v107, %v320
    %322 = vdwg.mxu0
    %323 = vmatprep.subr.bf16.mxu0 %v219
    %324 = vmatpush1.bf16.msra.mxu0 %v218
    %325 = vmatprep.subr.bf16.mxu0 %v223
    %326 = vmatpush1.bf16.msra.mxu0 %v222
    %327 = vmatprep.subr.bf16.mxu0 %v227
    %328 = vmatpush1.bf16.msra.mxu0 %v226
    %329 = vmatprep.subr.bf16.mxu0 %v231
    %330 = vmatpush1.bf16.msra.mxu0 %v230
    %331 = vmatprep.subr.bf16.mxu0 %v235
    %332 = vmatpush1.bf16.msra.mxu0 %v234
    %333 = vmatprep.subr.bf16.mxu0 %v239
    %334 = vmatpush1.bf16.msra.mxu0 %v238
    %335 = vmatprep.subr.bf16.mxu0 %v243
    %336 = vmatpush1.bf16.msra.mxu0 %v242
    %337 = vmatprep.subr.bf16.mxu0 %v247
    %338 = vmatpush1.bf16.msra.mxu0 %v246
    %339 = vmatprep.subr.bf16.mxu0 0
    %340 = vmatpush1.bf16.msra.mxu0 0
    %341 = vmatprep.subr.bf16.mxu0 0
    %342 = vmatpush1.bf16.msra.mxu0 0
    %343 = vmatprep.subr.bf16.mxu0 0
    %344 = vmatpush1.bf16.msra.mxu0 0
    %345 = vmatprep.subr.bf16.mxu0 0
    %346 = vmatpush1.bf16.msra.mxu0 0
    %347 = vmatprep.subr.bf16.mxu0 0
    %348 = vmatpush1.bf16.msra.mxu0 0
    %349 = vmatprep.subr.bf16.mxu0 0
    %350 = vmatpush1.bf16.msra.mxu0 0
    %351 = vmatprep.subr.bf16.mxu0 0
    %352 = vmatpush1.bf16.msra.mxu0 0
    %353 = vmatprep.subr.bf16.mxu0 0
    %354 = vmatpush1.bf16.msra.mxu0 0
    %355 = vmatprep.mubr.bf16.mxu0 0
    %356 = vmatmul.mubr.bf16.gmra.mrb[0].mxu0 %v65
    %v357 = vpop.f32.mrb[0].mxu0
    %v358 = vadd.f32 %v111, %v357
    %v359 = vpop.f32.mrb[0].mxu0
    %v360 = vadd.f32 %v115, %v359
    %v361 = vpop.f32.mrb[0].mxu0
    %v362 = vadd.f32 %v111, %v361
    %v363 = vpop.f32.mrb[0].mxu0
    %v364 = vadd.f32 %v115, %v363
    %365 = vdwg.mxu0
    %v366 = vmul.f32 %v315, 0.5
    %v367 = vmul.f32 %v317, 0.5
    %v368 = vmul.f32 %v358, 0.5
    %v369 = vmul.f32 %v360, 0.5
    %v370 = vmul.f32 %v319, 0.5
    %v371 = vmul.f32 %v321, 0.5
    %v372 = vmul.f32 %v362, 0.5
    %v373 = vmul.f32 %v364, 0.5
    %v374 = vmul.f32 %v315, 0.70710677
    %v375 = vmul.f32 %v317, 0.70710677
    %v376 = vmul.f32 %v358, 0.70710677
    %v377 = vmul.f32 %v360, 0.70710677
    %v378 = vmul.f32 %v319, 0.70710677
    %v379 = vmul.f32 %v321, 0.70710677
    %v380 = vmul.f32 %v362, 0.70710677
    %v381 = vmul.f32 %v364, 0.70710677
    %v382 = verf.f32.pop %v374
    %v383 = verf.f32.pop %v375
    %v384 = verf.f32.pop %v376
    %v385 = verf.f32.pop %v377
    %v386 = verf.f32.pop %v378
    %v387 = verf.f32.pop %v379
    %v388 = verf.f32.pop %v380
    %v389 = verf.f32.pop %v381
    %v390 = vadd.f32 %v382, 1.0
    %v391 = vadd.f32 %v383, 1.0
    %v392 = vadd.f32 %v384, 1.0
    %v393 = vadd.f32 %v385, 1.0
    %v394 = vadd.f32 %v386, 1.0
    %v395 = vadd.f32 %v387, 1.0
    %v396 = vadd.f32 %v388, 1.0
    %v397 = vadd.f32 %v389, 1.0
    %v398 = vmul.f32 %v366, %v390
    %v399 = vmul.f32 %v367, %v391
    %v400 = vmul.f32 %v368, %v392
    %v401 = vmul.f32 %v369, %v393
    %v402 = vmul.f32 %v370, %v394
    %v403 = vmul.f32 %v371, %v395
    %v404 = vmul.f32 %v372, %v396
    %v405 = vmul.f32 %v373, %v397
    %v406 = vpack.c.bf16 %v402, %v398
    %v407 = vpack.c.bf16 %v403, %v399
    %v408 = vpack.c.bf16 %v404, %v400
    %v409 = vpack.c.bf16 %v405, %v401
    %v410 = vld [vmem:[#allocation7] sm:$0xf]
    %v411 = vld [vmem:[#allocation7 + $0x4] sm:$0xf]
    %v412 = vld [vmem:[#allocation7 + $0x8] sm:$0xf]
    %v413 = vld [vmem:[#allocation7 + $0xc] sm:$0xf]
    %v414 = vld [vmem:[#allocation7 + $0x10] sm:$0xf]
    %v415 = vld [vmem:[#allocation7 + $0x14] sm:$0xf]
    %v416 = vld [vmem:[#allocation7 + $0x18] sm:$0xf]
    %v417 = vld [vmem:[#allocation7 + $0x1c] sm:$0xf]
    %v418 = vld [vmem:[#allocation7 + $0x20] sm:$0xf]
    %v419 = vld [vmem:[#allocation7 + $0x24] sm:$0xf]
    %v420 = vld [vmem:[#allocation7 + $0x28] sm:$0xf]
    %v421 = vld [vmem:[#allocation7 + $0x2c] sm:$0xf]
    %v422 = vld [vmem:[#allocation7 + $0x30] sm:$0xf]
    %v423 = vld [vmem:[#allocation7 + $0x34] sm:$0xf]
    %v424 = vld [vmem:[#allocation7 + $0x38] sm:$0xf]
    %v425 = vld [vmem:[#allocation7 + $0x3c] sm:$0xf]
    %v426 = vld [vmem:[#allocation7 + $0x40] sm:$0xf]
    %v427 = vld [vmem:[#allocation7 + $0x44] sm:$0xf]
    %v428 = vld [vmem:[#allocation7 + $0x48] sm:$0xf]
    %v429 = vld [vmem:[#allocation7 + $0x4c] sm:$0xf]
    %v430 = vld [vmem:[#allocation7 + $0x50] sm:$0xf]
    %v431 = vld [vmem:[#allocation7 + $0x54] sm:$0xf]
    %v432 = vld [vmem:[#allocation7 + $0x58] sm:$0xf]
    %v433 = vld [vmem:[#allocation7 + $0x5c] sm:$0xf]
    %v434 = vld [vmem:[#allocation7 + $0x60] sm:$0xf]
    %v435 = vld [vmem:[#allocation7 + $0x64] sm:$0xf]
    %v436 = vld [vmem:[#allocation7 + $0x68] sm:$0xf]
    %v437 = vld [vmem:[#allocation7 + $0x6c] sm:$0xf]
    %v438 = vld [vmem:[#allocation7 + $0x70] sm:$0xf]
    %v439 = vld [vmem:[#allocation7 + $0x74] sm:$0xf]
    %v440 = vld [vmem:[#allocation7 + $0x78] sm:$0xf]
    %v441 = vld [vmem:[#allocation7 + $0x7c] sm:$0xf]
    %v442 = vld [vmem:[#allocation7 + $0x80] sm:$0xf]
    %v443 = vld [vmem:[#allocation7 + $0x84] sm:$0xf]
    %v444 = vld [vmem:[#allocation7 + $0x88] sm:$0xf]
    %v445 = vld [vmem:[#allocation7 + $0x8c] sm:$0xf]
    %v446 = vld [vmem:[#allocation7 + $0x90] sm:$0xf]
    %v447 = vld [vmem:[#allocation7 + $0x94] sm:$0xf]
    %v448 = vld [vmem:[#allocation7 + $0x98] sm:$0xf]
    %v449 = vld [vmem:[#allocation7 + $0x9c] sm:$0xf]
    %v450 = vld [vmem:[#allocation7 + $0xa0] sm:$0xf]
    %v451 = vld [vmem:[#allocation7 + $0xa4] sm:$0xf]
    %v452 = vld [vmem:[#allocation7 + $0xa8] sm:$0xf]
    %v453 = vld [vmem:[#allocation7 + $0xac] sm:$0xf]
    %v454 = vld [vmem:[#allocation7 + $0xb0] sm:$0xf]
    %v455 = vld [vmem:[#allocation7 + $0xb4] sm:$0xf]
    %v456 = vld [vmem:[#allocation7 + $0xb8] sm:$0xf]
    %v457 = vld [vmem:[#allocation7 + $0xbc] sm:$0xf]
    %v458 = vld [vmem:[#allocation7 + $0xc0] sm:$0xf]
    %v459 = vld [vmem:[#allocation7 + $0xc4] sm:$0xf]
    %v460 = vld [vmem:[#allocation7 + $0xc8] sm:$0xf]
    %v461 = vld [vmem:[#allocation7 + $0xcc] sm:$0xf]
    %v462 = vld [vmem:[#allocation7 + $0xd0] sm:$0xf]
    %v463 = vld [vmem:[#allocation7 + $0xd4] sm:$0xf]
    %v464 = vld [vmem:[#allocation7 + $0xd8] sm:$0xf]
    %v465 = vld [vmem:[#allocation7 + $0xdc] sm:$0xf]
    %v466 = vld [vmem:[#allocation7 + $0xe0] sm:$0xf]
    %v467 = vld [vmem:[#allocation7 + $0xe4] sm:$0xf]
    %v468 = vld [vmem:[#allocation7 + $0xe8] sm:$0xf]
    %v469 = vld [vmem:[#allocation7 + $0xec] sm:$0xf]
    %v470 = vld [vmem:[#allocation7 + $0xf0] sm:$0xf]
    %v471 = vld [vmem:[#allocation7 + $0xf4] sm:$0xf]
    %v472 = vld [vmem:[#allocation7 + $0xf8] sm:$0xf]
    %v473 = vld [vmem:[#allocation7 + $0xfc] sm:$0xf]
    %v474 = vld [vmem:[%s4] sm:$0x1]
    %v476 = vlaneseq
    %v477 = vshrl.u32 %v476, 7
    %v478 = vsub.s32 0, %v477
    %v479 = vrot.slane %v474, %v478
    %v545 = vunpack.c.l.b16 %v410
    %v546 = vunpack.c.l.b16 %v411
    %v547 = vunpack.c.l.b16 %v412
    %v548 = vunpack.c.l.b16 %v413
    %v549 = vunpack.c.l.b16 %v414
    %v550 = vunpack.c.l.b16 %v415
    %v551 = vunpack.c.l.b16 %v416
    %v552 = vunpack.c.l.b16 %v417
    %v553 = vunpack.c.l.b16 %v418
    %v554 = vunpack.c.l.b16 %v419
    %v555 = vunpack.c.l.b16 %v420
    %v556 = vunpack.c.l.b16 %v421
    %v557 = vunpack.c.l.b16 %v422
    %v558 = vunpack.c.l.b16 %v423
    %v559 = vunpack.c.l.b16 %v424
    %v560 = vunpack.c.l.b16 %v425
    %v561 = vunpack.c.l.b16 %v426
    %v562 = vunpack.c.l.b16 %v427
    %v563 = vunpack.c.l.b16 %v428
    %v564 = vunpack.c.l.b16 %v429
    %v565 = vunpack.c.l.b16 %v430
    %v566 = vunpack.c.l.b16 %v431
    %v567 = vunpack.c.l.b16 %v432
    %v568 = vunpack.c.l.b16 %v433
    %v569 = vunpack.c.l.b16 %v434
    %v570 = vunpack.c.l.b16 %v435
    %v571 = vunpack.c.l.b16 %v436
    %v572 = vunpack.c.l.b16 %v437
    %v573 = vunpack.c.l.b16 %v438
    %v574 = vunpack.c.l.b16 %v439
    %v575 = vunpack.c.l.b16 %v440
    %v576 = vunpack.c.l.b16 %v441
    %v577 = vunpack.c.l.b16 %v442
    %v578 = vunpack.c.l.b16 %v443
    %v579 = vunpack.c.l.b16 %v444
    %v580 = vunpack.c.l.b16 %v445
    %v581 = vunpack.c.l.b16 %v446
    %v582 = vunpack.c.l.b16 %v447
    %v583 = vunpack.c.l.b16 %v448
    %v584 = vunpack.c.l.b16 %v449
    %v585 = vunpack.c.l.b16 %v450
    %v586 = vunpack.c.l.b16 %v451
    %v587 = vunpack.c.l.b16 %v452
    %v588 = vunpack.c.l.b16 %v453
    %v589 = vunpack.c.l.b16 %v454
    %v590 = vunpack.c.l.b16 %v455
    %v591 = vunpack.c.l.b16 %v456
    %v592 = vunpack.c.l.b16 %v457
    %v593 = vunpack.c.l.b16 %v458
    %v594 = vunpack.c.l.b16 %v459
    %v595 = vunpack.c.l.b16 %v460
    %v596 = vunpack.c.l.b16 %v461
    %v597 = vunpack.c.l.b16 %v462
    %v598 = vunpack.c.l.b16 %v463
    %v599 = vunpack.c.l.b16 %v464
    %v600 = vunpack.c.l.b16 %v465
    %v601 = vunpack.c.l.b16 %v466
    %v602 = vunpack.c.l.b16 %v467
    %v603 = vunpack.c.l.b16 %v468
    %v604 = vunpack.c.l.b16 %v469
    %v605 = vunpack.c.l.b16 %v470
    %v606 = vunpack.c.l.b16 %v471
    %v607 = vunpack.c.l.b16 %v472
    %v608 = vunpack.c.l.b16 %v473
    %v609 = vpack.c.b16 %v546, %v545
    %v610 = vpack.c.b16 %v548, %v547
    %v611 = vpack.c.b16 %v550, %v549
    %v612 = vpack.c.b16 %v552, %v551
    %v613 = vpack.c.b16 %v554, %v553
    %v614 = vpack.c.b16 %v556, %v555
    %v615 = vpack.c.b16 %v558, %v557
    %v616 = vpack.c.b16 %v560, %v559
    %v617 = vpack.c.b16 %v562, %v561
    %v618 = vpack.c.b16 %v564, %v563
    %v619 = vpack.c.b16 %v566, %v565
    %v620 = vpack.c.b16 %v568, %v567
    %v621 = vpack.c.b16 %v570, %v569
    %v622 = vpack.c.b16 %v572, %v571
    %v623 = vpack.c.b16 %v574, %v573
    %v624 = vpack.c.b16 %v576, %v575
    %v625 = vpack.c.b16 %v578, %v577
    %v626 = vpack.c.b16 %v580, %v579
    %v627 = vpack.c.b16 %v582, %v581
    %v628 = vpack.c.b16 %v584, %v583
    %v629 = vpack.c.b16 %v586, %v585
    %v630 = vpack.c.b16 %v588, %v587
    %v631 = vpack.c.b16 %v590, %v589
    %v632 = vpack.c.b16 %v592, %v591
    %v633 = vpack.c.b16 %v594, %v593
    %v634 = vpack.c.b16 %v596, %v595
    %v635 = vpack.c.b16 %v598, %v597
    %v636 = vpack.c.b16 %v600, %v599
    %v637 = vpack.c.b16 %v602, %v601
    %v638 = vpack.c.b16 %v604, %v603
    %v639 = vpack.c.b16 %v606, %v605
    %v640 = vpack.c.b16 %v608, %v607
    %673 = vmatprep.subr.bf16.mxu0 0
    %674 = vmatpush1.bf16.msra.mxu0 %v609
    %675 = vmatprep.subr.bf16.mxu0 0
    %676 = vmatpush1.bf16.msra.mxu0 %v610
    %677 = vmatprep.subr.bf16.mxu0 0
    %678 = vmatpush1.bf16.msra.mxu0 %v611
    %679 = vmatprep.subr.bf16.mxu0 0
    %680 = vmatpush1.bf16.msra.mxu0 %v612
    %681 = vmatprep.subr.bf16.mxu0 0
    %682 = vmatpush1.bf16.msra.mxu0 %v613
    %683 = vmatprep.subr.bf16.mxu0 0
    %684 = vmatpush1.bf16.msra.mxu0 %v614
    %685 = vmatprep.subr.bf16.mxu0 0
    %686 = vmatpush1.bf16.msra.mxu0 %v615
    %687 = vmatprep.subr.bf16.mxu0 0
    %688 = vmatpush1.bf16.msra.mxu0 %v616
    %689 = vmatprep.subr.bf16.mxu0 0
    %690 = vmatpush1.bf16.msra.mxu0 %v617
    %691 = vmatprep.subr.bf16.mxu0 0
    %692 = vmatpush1.bf16.msra.mxu0 %v618
    %693 = vmatprep.subr.bf16.mxu0 0
    %694 = vmatpush1.bf16.msra.mxu0 %v619
    %695 = vmatprep.subr.bf16.mxu0 0
    %696 = vmatpush1.bf16.msra.mxu0 %v620
    %697 = vmatprep.subr.bf16.mxu0 0
    %698 = vmatpush1.bf16.msra.mxu0 %v621
    %699 = vmatprep.subr.bf16.mxu0 0
    %700 = vmatpush1.bf16.msra.mxu0 %v622
    %701 = vmatprep.subr.bf16.mxu0 0
    %702 = vmatpush1.bf16.msra.mxu0 %v623
    %703 = vmatprep.subr.bf16.mxu0 0
    %704 = vmatpush1.bf16.msra.mxu0 %v624
    %705 = vmatprep.mubr.bf16.mxu0 %v407
    %706 = vmatmul.mubr.bf16.gmra.mrb[0].mxu0 %v406
    %v707 = vpop.f32.mrb[0].mxu0
    %v708 = vadd.f32 %v479, %v707
    %v709 = vpop.f32.mrb[0].mxu0
    %v710 = vpop.f32.mrb[0].mxu0
    %v711 = vadd.f32 %v479, %v710
    %v712 = vpop.f32.mrb[0].mxu0
    %713 = vdwg.mxu0
    %714 = vmatprep.subr.bf16.mxu0 0
    %715 = vmatpush1.bf16.msra.mxu0 %v625
    %716 = vmatprep.subr.bf16.mxu0 0
    %717 = vmatpush1.bf16.msra.mxu0 %v626
    %718 = vmatprep.subr.bf16.mxu0 0
    %719 = vmatpush1.bf16.msra.mxu0 %v627
    %720 = vmatprep.subr.bf16.mxu0 0
    %721 = vmatpush1.bf16.msra.mxu0 %v628
    %722 = vmatprep.subr.bf16.mxu0 0
    %723 = vmatpush1.bf16.msra.mxu0 %v629
    %724 = vmatprep.subr.bf16.mxu0 0
    %725 = vmatpush1.bf16.msra.mxu0 %v630
    %726 = vmatprep.subr.bf16.mxu0 0
    %727 = vmatpush1.bf16.msra.mxu0 %v631
    %728 = vmatprep.subr.bf16.mxu0 0
    %729 = vmatpush1.bf16.msra.mxu0 %v632
    %730 = vmatprep.subr.bf16.mxu0 0
    %731 = vmatpush1.bf16.msra.mxu0 %v633
    %732 = vmatprep.subr.bf16.mxu0 0
    %733 = vmatpush1.bf16.msra.mxu0 %v634
    %734 = vmatprep.subr.bf16.mxu0 0
    %735 = vmatpush1.bf16.msra.mxu0 %v635
    %736 = vmatprep.subr.bf16.mxu0 0
    %737 = vmatpush1.bf16.msra.mxu0 %v636
    %738 = vmatprep.subr.bf16.mxu0 0
    %739 = vmatpush1.bf16.msra.mxu0 %v637
    %740 = vmatprep.subr.bf16.mxu0 0
    %741 = vmatpush1.bf16.msra.mxu0 %v638
    %742 = vmatprep.subr.bf16.mxu0 0
    %743 = vmatpush1.bf16.msra.mxu0 %v639
    %744 = vmatprep.subr.bf16.mxu0 0
    %745 = vmatpush1.bf16.msra.mxu0 %v640
    %746 = vmatprep.mubr.bf16.mxu0 %v409
    %747 = vmatmul.mubr.bf16.gmra.mrb[0].mxu0 %v408
    %v748 = vpop.f32.mrb[0].mxu0
    %v749 = vadd.f32 %v708, %v748
    %v750 = vpop.f32.mrb[0].mxu0
    %v751 = vpop.f32.mrb[0].mxu0
    %v752 = vadd.f32 %v711, %v751
    %v753 = vpop.f32.mrb[0].mxu0
    %754 = vdwg.mxu0
    %755 = vst [vmem:[#allocation8] sm:$0xff] %v749
    %756 = vst [vmem:[#allocation8 + $0x8] sm:$0xff] %v752
    // Predicated region
    $region34: #{tpu_custom_call.1} parent=1 // pred_check
      _
    $region35: #{tpu_custom_call.1} parent=1 // pred_check_branch
      %758 = sbr.rel (0) target = $region37
    $region36: #{tpu_custom_call.1} parent=1 // pred_region
      %s760 = ssub.s32 256, 256
      %761 = vsyncadd [#allocation4], %s760
      %s762 = sshll.u32 [#allocation8], 4
      %s763 = int_to_ptr.vmem [resolvable:$true] %s762
      %768 = dma.vmem_to_hbm [thread:$0]  %s763, 256, %s5, [#allocation4], 128, 128, 8
    $region37: #{tpu_custom_call.1} parent=1 // pred_fallthru
      _
    // Predicated region
    $region38: #{tpu_custom_call.1} parent=1 // pred_check
      _
    $region39: #{tpu_custom_call.1} parent=1 // pred_check_branch
      %770 = sbr.rel (0) target = $region41
    $region40: #{tpu_custom_call.1} parent=1 // pred_region
      %771 = dma.done [#allocation4], 256
    $region41: #{tpu_custom_call.1} parent=1 // pred_fallthru
      _
    %772 = vsyncpa [#allocation3], 1
    %773 = vsyncpa [#allocation6], 1
    %774 = vsyncpa [#allocation4], 1

</llo_original>
